<compile_context>
chip_gen: v5e
topology: v5e:2x2
jax: 0.10.0
libtpu: 0.0.40
codegen_flags: <defaults>
</compile_context>

<pallas_src>
import jax
import jax.numpy as jnp
from jax.experimental import pallas as pl
from jax.experimental.pallas import tpu as pltpu


def _prefix_kernel(x_ref, w_ref, b_ref, o_ref, acc_ref):
    # x_ref: (tm, tk)   w_ref: (tk, 2*dim)   b_ref: (1, 2*dim)
    # o_ref: (tm, 3*dim)   acc_ref: (tm, 2*dim) f32 scratch
    k = pl.program_id(1)

    @pl.when(k == 0)
    def _init():
        acc_ref[...] = jnp.zeros_like(acc_ref)

    acc_ref[...] += jnp.dot(x_ref[...], w_ref[...],
                            preferred_element_type=jnp.float32)

    @pl.when(k == pl.num_programs(1) - 1)
    def _finalize():
        dim = o_ref.shape[-1] // 3
        kv = acc_ref[...] + b_ref[...]  # bias broadcast over rows
        # Write the two output sub-slabs directly (no concat-in-vregs copy).
        o_ref[:, :dim] = jnp.zeros((o_ref.shape[0], dim), dtype=o_ref.dtype)
        o_ref[:, dim:] = kv.astype(o_ref.dtype)


def _choose_tiles(M, dim, itemsize, vmem_budget_bytes=24 << 20):
    """Pick (tile_m, tile_k) so double-buffered blocks + f32 acc fit VMEM."""
    # K tile: full dim when small; otherwise the largest 128-multiple divisor
    # of dim <= 512 (keeps the streamed weight block modest).  Falls back to
    # the full dim (weight fully resident) if no such divisor exists.
    tk = dim
    if dim > 512:
        for cand in (512, 384, 256, 128):
            if dim % cand == 0:
                tk = cand
                break
    # Per-row bytes: double-buffered x (tk) + double-buffered out (3*dim)
    # + f32 accumulator (2*dim).
    per_row = (2 * tk + 2 * 3 * dim) * itemsize + 2 * dim * 4
    # Fixed bytes: double-buffered weight block + bias.
    fixed = (2 * tk * 2 * dim + 2 * 2 * dim) * itemsize
    budget = max(vmem_budget_bytes - fixed, 2 << 20)
    tm = int(budget // per_row)
    tm = max(8, min(tm, 1024))
    tm -= tm % 8
    if M > 8:
        # Keep at least two row-steps so v7x's two TensorCores both get work.
        half = (((M + 1) // 2) + 7) // 8 * 8
        tm = min(tm, max(8, half))
    if M <= tm:
        tm = M  # full row extent is always a legal block shape
    return tm, tk


@jax.jit
def vanilla_prefix_forward(x, weight, bias):
    """x: (B, S, dim); weight: (dim, 2*dim) [transposed torch layout]; bias: (2*dim,).
    Returns (B, S, 3*dim) = concat([zeros(..., dim), x @ weight + bias], -1)."""
    B, S, dim = x.shape
    M = B * S
    tm, tk = _choose_tiles(M, dim, x.dtype.itemsize)

    x2d = x.reshape(M, dim)
    b2d = bias.reshape(1, 2 * dim)

    grid = (pl.cdiv(M, tm), pl.cdiv(dim, tk))

    out2d = pl.pallas_call(
        _prefix_kernel,
        out_shape=jax.ShapeDtypeStruct((M, 3 * dim), x.dtype),
        grid_spec=pltpu.PrefetchScalarGridSpec(
            num_scalar_prefetch=0,
            grid=grid,
            in_specs=[
                pl.BlockSpec((tm, tk), lambda i, k: (i, k)),        # x row/K slab
                pl.BlockSpec((tk, 2 * dim), lambda i, k: (k, 0)),   # weight K slab
                pl.BlockSpec((1, 2 * dim), lambda i, k: (0, 0)),    # bias
            ],
            out_specs=pl.BlockSpec((tm, 3 * dim), lambda i, k: (i, 0)),
            scratch_shapes=[pltpu.VMEM((tm, 2 * dim), jnp.float32)],
        ),
        compiler_params=pltpu.CompilerParams(
            dimension_semantics=("parallel", "arbitrary"),
            vmem_limit_bytes=40 << 20,
        ),
    )(x2d, weight, b2d)

    return out2d.reshape(B, S, 3 * dim)


def _reference(x, weight, bias):
    kv = x @ weight + bias
    q = jnp.zeros(x.shape[:-1] + (x.shape[-1],), x.dtype)
    return jnp.concatenate([q, kv], axis=-1)


if __name__ == "__main__":
    key = jax.random.PRNGKey(0)

    # Case 1: small shapes consistent with the module (B=2, S=8, dim=32).
    B, S, dim = 2, 8, 32
    kx, kw, kb = jax.random.split(key, 3)
    x = jax.random.normal(kx, (B, S, dim), dtype=jnp.float32)
    bound = 1.0 / (dim ** 0.5)  # torch nn.Linear default init bound
    weight = jax.random.uniform(kw, (dim, 2 * dim), jnp.float32, -bound, bound)
    bias = jax.random.uniform(kb, (2 * dim,), jnp.float32, -bound, bound)

    out = jax.block_until_ready(vanilla_prefix_forward(x, weight, bias))
    ref = _reference(x, weight, bias)
    assert out.shape == (B, S, 3 * dim)
    assert jnp.allclose(out, ref, atol=1e-5, rtol=1e-5)

    # Case 2: ragged row count (B*S not a multiple of the row tile) exercises
    # the pl.cdiv grid and masked last-block writeback.
    B2, S2 = 3, 5
    x2 = jax.random.normal(jax.random.PRNGKey(1), (B2, S2, dim), dtype=jnp.float32)
    out2 = jax.block_until_ready(vanilla_prefix_forward(x2, weight, bias))
    ref2 = _reference(x2, weight, bias)
    assert out2.shape == (B2, S2, 3 * dim)
    assert jnp.allclose(out2, ref2, atol=1e-5, rtol=1e-5)

    print("KERNEL_OK")
</pallas_src>

<mosaic_0001>
module attributes {stable_mosaic.version = 11 : i64} {
  func.func @_prefix_kernel(%arg0: i32, %arg1: i32, %arg2: memref<8x32xf32, #tpu.memory_space<vmem>>, %arg3: memref<32x64xf32, #tpu.memory_space<vmem>>, %arg4: memref<1x64xf32, #tpu.memory_space<vmem>>, %arg5: memref<8x96xf32, #tpu.memory_space<vmem>>, %arg6: memref<8x64xf32, #tpu.memory_space<vmem>>) attributes {dimension_semantics = [#tpu.dimension_semantics<parallel>, #tpu.dimension_semantics<arbitrary>], iteration_bounds = array<i64: 2, 1>, scalar_prefetch = 0 : i64, scratch_operands = 1 : i64, tpu.core_type = #tpu.core_type<tc>, window_params = [{transform_indices = @transform_0, window_bounds = array<i64: 8, 32>}, {transform_indices = @transform_1, window_bounds = array<i64: 32, 64>}, {pipeline_mode = #tpu.pipeline_mode<synchronous>, transform_indices = @transform_2, window_bounds = array<i64: 1, 64>}, {transform_indices = @transform_3, window_bounds = array<i64: 8, 96>}]} {
    %c0_i32 = arith.constant 0 : i32
    %0 = arith.cmpi eq, %arg1, %c0_i32 : i32
    %1 = arith.extui %0 : i1 to i32
    %c0_i32_0 = arith.constant 0 : i32
    %2 = arith.cmpi ne, %1, %c0_i32_0 : i32
    scf.if %2 {
      %cst_10 = arith.constant 0.000000e+00 : f32
      %12 = vector.broadcast %cst_10 : f32 to vector<8x64xf32>
      %c0_11 = arith.constant 0 : index
      %c0_12 = arith.constant 0 : index
      %13 = vector.load %arg6[%c0_11, %c0_12] : memref<8x64xf32, #tpu.memory_space<vmem>>, vector<8x64xf32>
      tpu.vector_store %arg6[%c0_11, %c0_12], %12 {strides = array<i32>} : memref<8x64xf32, #tpu.memory_space<vmem>>, vector<8x64xf32>,
    } else {
    }
    %c0 = arith.constant 0 : index
    %c0_1 = arith.constant 0 : index
    %3 = vector.load %arg6[%c0, %c0_1] : memref<8x64xf32, #tpu.memory_space<vmem>>, vector<8x64xf32>
    %c0_2 = arith.constant 0 : index
    %c0_3 = arith.constant 0 : index
    %4 = vector.load %arg2[%c0_2, %c0_3] : memref<8x32xf32, #tpu.memory_space<vmem>>, vector<8x32xf32>
    %c0_4 = arith.constant 0 : index
    %c0_5 = arith.constant 0 : index
    %5 = vector.load %arg3[%c0_4, %c0_5] : memref<32x64xf32, #tpu.memory_space<vmem>>, vector<32x64xf32>
    %cst = arith.constant dense<0.000000e+00> : vector<8x64xf32>
    %6 = tpu.matmul %4, %5, %cst {dimension_numbers = #tpu.dot_dimension_numbers<[1], [0], [0], [1], [0, 0, 1, 1], [], []>} : vector<8x32xf32>, vector<32x64xf32>, vector<8x64xf32> -> vector<8x64xf32>
    %7 = arith.addf %3, %6 : vector<8x64xf32>
    %c0_6 = arith.constant 0 : index
    %c0_7 = arith.constant 0 : index
    %8 = vector.load %arg6[%c0_6, %c0_7] : memref<8x64xf32, #tpu.memory_space<vmem>>, vector<8x64xf32>
    tpu.vector_store %arg6[%c0_6, %c0_7], %7 {strides = array<i32>} : memref<8x64xf32, #tpu.memory_space<vmem>>, vector<8x64xf32>,
    %c0_i32_8 = arith.constant 0 : i32
    %9 = arith.cmpi eq, %arg1, %c0_i32_8 : i32
    %10 = arith.extui %9 : i1 to i32
    %c0_i32_9 = arith.constant 0 : i32
    %11 = arith.cmpi ne, %10, %c0_i32_9 : i32
    scf.if %11 {
      %c0_10 = arith.constant 0 : index
      %c0_11 = arith.constant 0 : index
      %12 = vector.load %arg6[%c0_10, %c0_11] : memref<8x64xf32, #tpu.memory_space<vmem>>, vector<8x64xf32>
      %c0_12 = arith.constant 0 : index
      %c0_13 = arith.constant 0 : index
      %13 = vector.load %arg4[%c0_12, %c0_13] : memref<1x64xf32, #tpu.memory_space<vmem>>, vector<1x64xf32>
      %14 = vector.broadcast %13 : vector<1x64xf32> to vector<8x64xf32>
      %15 = arith.addf %12, %14 : vector<8x64xf32>
      %cst_14 = arith.constant 0.000000e+00 : f32
      %16 = vector.broadcast %cst_14 : f32 to vector<8x32xf32>
      %c0_15 = arith.constant 0 : index
      %c0_16 = arith.constant 0 : index
      %17 = vector.load %arg5[%c0_15, %c0_16] : memref<8x96xf32, #tpu.memory_space<vmem>>, vector<8x32xf32>
      tpu.vector_store %arg5[%c0_15, %c0_16], %16 {strides = array<i32>} : memref<8x96xf32, #tpu.memory_space<vmem>>, vector<8x32xf32>,
      %c0_17 = arith.constant 0 : index
      %c32 = arith.constant 32 : index
      %18 = vector.load %arg5[%c0_17, %c32] : memref<8x96xf32, #tpu.memory_space<vmem>>, vector<8x64xf32>
      tpu.vector_store %arg5[%c0_17, %c32], %15 {strides = array<i32>} : memref<8x96xf32, #tpu.memory_space<vmem>>, vector<8x64xf32>,
    } else {
    }
    return
  }
  func.func @transform_0(%arg0: i32, %arg1: i32) -> (i32, i32) {
    %c0_i32 = arith.constant 0 : i32
    return %arg0, %arg1 : i32, i32
  }
  func.func @transform_1(%arg0: i32, %arg1: i32) -> (i32, i32) {
    %c0_i32 = arith.constant 0 : i32
    %c0_i32_0 = arith.constant 0 : i32
    return %arg1, %c0_i32 : i32, i32
  }
  func.func @transform_2(%arg0: i32, %arg1: i32) -> (i32, i32) {
    %c0_i32 = arith.constant 0 : i32
    %c0_i32_0 = arith.constant 0 : i32
    %c0_i32_1 = arith.constant 0 : i32
    return %c0_i32, %c0_i32_0 : i32, i32
  }
  func.func @transform_3(%arg0: i32, %arg1: i32) -> (i32, i32) {
    %c0_i32 = arith.constant 0 : i32
    %c0_i32_0 = arith.constant 0 : i32
    return %arg0, %c0_i32 : i32, i32
  }
}

</mosaic_0001>

<llo_original>
// kernel: vanilla_prefix_forward.1
$region0: #{vanilla_prefix_forward.1}
  #allocation0 [shape = 'u32[]', space=smem, size = 0x4, offset = 0x4, fixed_abs, tag = 'smem constant byte address 0x4 - core index']
  #allocation1 [shape = 'u32[72,128]{1,0:T(1,128)}', space=vmem, size = 0x9000, scoped, tag = 'internal scratch']
  #allocation2 [shape = 'f32[8,64]{1,0:T(8,128)}', space=vmem, size = 0x1000, scoped, tag = 'scratch operand']
  %s0 = inlined_call_operand.hbm [shape: f32[16,32], index: 0, kind: input, shape index: {}]
  %s1 = inlined_call_operand.hbm [shape: f32[32,64], index: 1, kind: input, shape index: {}]
  %s2 = inlined_call_operand.vmem [shape: f32[1,64], index: 2, kind: input, shape index: {}]
  %s3 = inlined_call_operand.hbm [shape: f32[16,96], index: 3, kind: output, shape index: {}]
  %s4 = sld [smem:[#allocation0]]
  $region61: #{vanilla_prefix_forward.1} parent=0
    _
  %s6 = ssub.s32 1, %s4
  %s7 = scalar_select 0, %s6, %s4
  $region1: #{vanilla_prefix_forward.1} parent=0
    #allocation3 [shape = 'u8[8192]{0}', space=vmem, size = 0x2000, scoped, tag = 'input window, operand 0']
    #allocation4 [shape = 's32[2]{0}', space=sflag, size = 0x8, scoped, tag = 'scoped memory for vanilla_prefix_forward.1']
    #allocation5 [shape = 's32[2]{0}', space=sflag, size = 0x8, scoped, tag = 'scoped memory for vanilla_prefix_forward.1']
    #allocation6 [shape = 'u8[16384]{0}', space=vmem, size = 0x4000, scoped, tag = 'input window, operand 1, single buffered']
    #allocation7 [shape = 's32[1]{0}', space=sflag, size = 0x4, scoped, tag = 'scoped memory for vanilla_prefix_forward.1']
    #allocation8 [shape = 'u8[8192]{0}', space=vmem, size = 0x2000, scoped, tag = 'output window, operand 0']
    %8 = vsyncpa [#allocation4], 0
    %s9 = scalar_lea.sflag [#allocation4], 1
    %10 = vsyncpa %s9, 0
    %11 = vsyncpa [#allocation7], 0
    %12 = vsyncpa [#allocation5], 0
    %s13 = scalar_lea.sflag [#allocation5], 1
    %14 = vsyncpa %s13, 0
    loop: start=0, step=1, limit=4
    $region2: #{vanilla_prefix_forward.1} parent=1 // loop_pre_header
      _
    $region3: #{vanilla_prefix_forward.1} parent=1 // loop_header
      %s16 = sphi 0, %s20
      %p17 = scmp.ge.s32.totalorder %s16, 4
      %s23 = sphi 0, %s35
      %s24 = sphi 0, %s31
      %s25 = sphi 0, %s23
      %s26 = sphi 0, %s24
      %s27 = sphi 0, %s25
      %s28 = sphi 0, %s26
      %s40 = sphi 0, %s42
      %s43 = sphi 0, %s40
      %s44 = sphi 0, %s43
      %s60 = sphi 0, %s44
      %s66 = sphi 0, %s68
      %s69 = sphi 0, %s66
      %s70 = sphi 0, %s69
      %s86 = sphi 0, %s70
      %s90 = sphi 0, %s90
      %s92 = sphi 0, %s90
      %s93 = sphi 0, %s92
      %s107 = sphi 0, %s93
      %s113 = sphi 0, %s115
      %s116 = sphi 0, %s113
      %s117 = sphi 0, %s116
      %s133 = sphi 0, %s117
    $region4: #{vanilla_prefix_forward.1} parent=1 // loop_header_branch
      %19 = sbr.rel (%p17) target = $region8
    $region5: #{vanilla_prefix_forward.1} parent=1 // loop_body
      %s21 = ssub.s32 %s16, 1
      %s22 = ssub.s32 %s16, 2
      %s29 = sadd.s32 1, %s24
      %p30 = scmp.ge.s32.totalorder %s29, 1
      %s31 = scalar_select %p30, 0, %s29
      %s32 = sadd.s32 1, %s23
      %s33 = scalar_select %p30, %s32, %s23
      %p34 = scmp.ge.s32.totalorder %s33, 2
      %s35 = scalar_select %p34, 0, %s33
      %s36 = ssub.s32 %s23, %s35
      %s37 = ssub.s32 %s24, %s31
      %s38 = sor.u32 %s36, %s37
      %p39 = scmp.eq.s32.totalorder %s38, 0
      %s41 = sadd.s32 %s40, 1
      %s42 = scalar_select %p39, %s40, %s41
      %p45 = pneg %p39
      %p46 = scmp.eq.s32.totalorder %s16, 1
      %p47 = por %p45, %p46
      %p48 = scmp.ne.s32.totalorder %s40, %s43
      %p49 = scmp.eq.s32.totalorder %s16, 0
      %p50 = por %p48, %p49
      %p51 = scmp.ne.s32.totalorder %s40, %s43
      %p52 = scmp.eq.s32.totalorder %s21, 1
      %p53 = por %p51, %p52
      %p54 = scmp.ne.s32.totalorder %s43, %s44
      %p55 = scmp.eq.s32.totalorder %s21, 0
      %p56 = por %p54, %p55
      %p57 = scmp.ne.s32.totalorder %s43, %s44
      %p58 = scmp.eq.s32.totalorder %s22, 1
      %p59 = por %p57, %p58
      %p61 = scmp.ne.s32.totalorder %s44, %s60
      %p62 = scmp.eq.s32.totalorder %s22, 0
      %p63 = por %p61, %p62
      %s64 = ssub.s32 %s24, %s31
      %p65 = scmp.eq.s32.totalorder %s64, 0
      %s67 = sadd.s32 %s66, 1
      %s68 = scalar_select %p65, %s66, %s67
      %p71 = pneg %p65
      %p72 = scmp.eq.s32.totalorder %s16, 1
      %p73 = por %p71, %p72
      %p74 = scmp.ne.s32.totalorder %s66, %s69
      %p75 = scmp.eq.s32.totalorder %s16, 0
      %p76 = por %p74, %p75
      %p77 = scmp.ne.s32.totalorder %s66, %s69
      %p78 = scmp.eq.s32.totalorder %s21, 1
      %p79 = por %p77, %p78
      %p80 = scmp.ne.s32.totalorder %s69, %s70
      %p81 = scmp.eq.s32.totalorder %s21, 0
      %p82 = por %p80, %p81
      %p83 = scmp.ne.s32.totalorder %s69, %s70
      %p84 = scmp.eq.s32.totalorder %s22, 1
      %p85 = por %p83, %p84
      %p87 = scmp.ne.s32.totalorder %s70, %s86
      %p88 = scmp.eq.s32.totalorder %s22, 0
      %p89 = por %p87, %p88
      %s91 = sadd.s32 %s90, 1
      %p94 = scmp.eq.s32.totalorder %s16, 1
      %p95 = scmp.ne.s32.totalorder %s90, %s92
      %p96 = scmp.eq.s32.totalorder %s16, 0
      %p97 = por %p95, %p96
      %p98 = scmp.ne.s32.totalorder %s90, %s92
      %p99 = scmp.eq.s32.totalorder %s21, 1
      %p100 = por %p98, %p99
      %p101 = scmp.ne.s32.totalorder %s92, %s93
      %p102 = scmp.eq.s32.totalorder %s21, 0
      %p103 = por %p101, %p102
      %p104 = scmp.ne.s32.totalorder %s92, %s93
      %p105 = scmp.eq.s32.totalorder %s22, 1
      %p106 = por %p104, %p105
      %p108 = scmp.ne.s32.totalorder %s93, %s107
      %p109 = scmp.eq.s32.totalorder %s22, 0
      %p110 = por %p108, %p109
      %s111 = ssub.s32 %s23, %s35
      %p112 = scmp.eq.s32.totalorder %s111, 0
      %s114 = sadd.s32 %s113, 1
      %s115 = scalar_select %p112, %s113, %s114
      %p118 = pneg %p112
      %p119 = scmp.eq.s32.totalorder %s16, 1
      %p120 = por %p118, %p119
      %p121 = scmp.ne.s32.totalorder %s113, %s116
      %p122 = scmp.eq.s32.totalorder %s16, 0
      %p123 = por %p121, %p122
      %p124 = scmp.ne.s32.totalorder %s113, %s116
      %p125 = scmp.eq.s32.totalorder %s21, 1
      %p126 = por %p124, %p125
      %p127 = scmp.ne.s32.totalorder %s116, %s117
      %p128 = scmp.eq.s32.totalorder %s21, 0
      %p129 = por %p127, %p128
      %p130 = scmp.ne.s32.totalorder %s116, %s117
      %p131 = scmp.eq.s32.totalorder %s22, 1
      %p132 = por %p130, %p131
      %p134 = scmp.ne.s32.totalorder %s117, %s133
      %p135 = scmp.eq.s32.totalorder %s22, 0
      %p136 = por %p134, %p135
      %p137 = scmp.le.s32.totalorder 1, %s16
      %p138 = scmp.lt.s32.totalorder %s16, 3
      %p139 = pnand %p137, %p138
      %p140 = pneg %p139
      // Predicated region
      $region9: #{vanilla_prefix_forward.1} parent=5 // pred_check
        _
      $region10: #{vanilla_prefix_forward.1} parent=5 // pred_check_branch
        %142 = sbr.rel (%p139) target = $region12
      $region11: #{vanilla_prefix_forward.1} parent=5 // pred_region
        %s143 = ssub.s32 %s16, 1
        // Predicated region
        $region13: #{vanilla_prefix_forward.1} parent=11 // pred_check
          %p144 = pneg %p82
        $region14: #{vanilla_prefix_forward.1} parent=11 // pred_check_branch
          %146 = sbr.rel (%p144) target = $region16
        $region15: #{vanilla_prefix_forward.1} parent=11 // pred_region
          %s147 = smul.u32 4, %s26
          %149 = vsyncadd [#allocation7], 0
          %s150 = smul.addr %s147, 8
          %s151 = scalar_lea.hbm %s1, %s150
          %s152 = sshll.u32 %s151, 4
          %s153 = int_to_ptr.hbm [resolvable:$true] %s152
          %s154 = sshll.u32 [#allocation6], 4
          %s155 = int_to_ptr.vmem [resolvable:$true] %s154
          %160 = dma.hbm_to_vmem [thread:$0]  %s153, 512, %s155, [#allocation7], 128, 128, 8
        $region16: #{vanilla_prefix_forward.1} parent=11 // pred_fallthru
          _
        // Predicated region
        $region17: #{vanilla_prefix_forward.1} parent=11 // pred_check
          %p161 = pneg %p103
        $region18: #{vanilla_prefix_forward.1} parent=11 // pred_check_branch
          %163 = sbr.rel (%p161) target = $region20
        $region19: #{vanilla_prefix_forward.1} parent=11 // pred_region
          _
        $region20: #{vanilla_prefix_forward.1} parent=11 // pred_fallthru
          _
      $region12: #{vanilla_prefix_forward.1} parent=5 // pred_fallthru
        _
      %p164 = scmp.lt.s32.totalorder %s16, 2
      // Predicated region
      $region21: #{vanilla_prefix_forward.1} parent=5 // pred_check
        %p165 = pneg %p164
      $region22: #{vanilla_prefix_forward.1} parent=5 // pred_check_branch
        %167 = sbr.rel (%p165) target = $region24
      $region23: #{vanilla_prefix_forward.1} parent=5 // pred_region
        // Predicated region
        $region25: #{vanilla_prefix_forward.1} parent=23 // pred_check
          %p168 = pneg %p50
        $region26: #{vanilla_prefix_forward.1} parent=23 // pred_check_branch
          %170 = sbr.rel (%p168) target = $region28
        $region27: #{vanilla_prefix_forward.1} parent=23 // pred_region
          %s171 = sand.u32 %s40, 1
          %s172 = scalar_lea.sflag [#allocation4], %s171
          %s173 = sand.u32 %s40, 1
          %s174 = smul.addr %s173, 8
          %s175 = scalar_lea.vmem [#allocation3], %s174
          %177 = vsyncadd %s172, 0
          %s178 = sadd.s32 %s24, %s23
          %s179 = smul.addr %s178, 8
          %s180 = scalar_lea.hbm %s0, %s179
          %s182 = sshll.u32 %s180, 4
          %s183 = int_to_ptr.hbm [resolvable:$true] %s182
          %s184 = sshll.u32 %s175, 4
          %s185 = int_to_ptr.vmem [resolvable:$true] %s184
          %187 = dma.hbm_to_vmem [thread:$0]  %s183, 128, %s185, %s172
        $region28: #{vanilla_prefix_forward.1} parent=23 // pred_fallthru
          _
      $region24: #{vanilla_prefix_forward.1} parent=5 // pred_fallthru
        _
      %p188 = scmp.le.s32.totalorder 1, %s16
      %p189 = scmp.lt.s32.totalorder %s16, 3
      %p190 = pnand %p188, %p189
      %p191 = pneg %p190
      // Predicated region
      $region29: #{vanilla_prefix_forward.1} parent=5 // pred_check
        _
      $region30: #{vanilla_prefix_forward.1} parent=5 // pred_check_branch
        %193 = sbr.rel (%p190) target = $region32
      $region31: #{vanilla_prefix_forward.1} parent=5 // pred_region
        %s194 = ssub.s32 %s16, 1
        %s195 = sand.u32 %s43, 1
        %s196 = scalar_lea.sflag [#allocation4], %s195
        %s197 = sand.u32 %s43, 1
        %s198 = smul.addr %s197, 8
        %s199 = scalar_lea.vmem [#allocation3], %s198
        // Predicated region
        $region33: #{vanilla_prefix_forward.1} parent=31 // pred_check
          %p200 = pneg %p56
        $region34: #{vanilla_prefix_forward.1} parent=31 // pred_check_branch
          %202 = sbr.rel (%p200) target = $region36
        $region35: #{vanilla_prefix_forward.1} parent=31 // pred_region
          %204 = dma.done %s196, 128
        $region36: #{vanilla_prefix_forward.1} parent=31 // pred_fallthru
          _
        // Predicated region
        $region37: #{vanilla_prefix_forward.1} parent=31 // pred_check
          %p205 = pneg %p82
        $region38: #{vanilla_prefix_forward.1} parent=31 // pred_check_branch
          %207 = sbr.rel (%p205) target = $region40
        $region39: #{vanilla_prefix_forward.1} parent=31 // pred_region
          %209 = dma.done [#allocation7], 512
        $region40: #{vanilla_prefix_forward.1} parent=31 // pred_fallthru
          _
        %s210 = sand.u32 %s43, 1
        %s211 = scalar_lea.sflag [#allocation4], %s210
        %s212 = sand.u32 %s43, 1
        %s213 = smul.addr %s212, 8
        %s214 = scalar_lea.vmem [#allocation3], %s213
        %p215 = pneg %p56
        %p216 = pneg %p53
        %p217 = pneg %p82
        %p218 = pneg %p79
        %p219 = pneg %p103
        %p220 = pneg %p100
        %p221 = pneg %p129
        %p222 = pneg %p126
        %s223 = sand.u32 %s116, 1
        %s224 = scalar_lea.sflag [#allocation5], %s223
        %s225 = sand.u32 %s116, 1
        %s226 = smul.addr %s225, 8
        %s227 = scalar_lea.vmem [#allocation8], %s226
        %s228 = smul.u32 4, %s26
        %p229 = scmp.eq.s32.totalorder %s26, 0
        // Predicated region
        $region41: #{vanilla_prefix_forward.1} parent=31 // pred_check
          %p230 = pneg %p229
        $region42: #{vanilla_prefix_forward.1} parent=31 // pred_check_branch
          %232 = sbr.rel (%p230) target = $region44
        $region43: #{vanilla_prefix_forward.1} parent=31 // pred_region
          %vm233 = vcmask 523264
          %234 = vst.msk [vmem:[#allocation2] sm:$0xff] %vm233, 0.0
        $region44: #{vanilla_prefix_forward.1} parent=31 // pred_fallthru
          _
        %v235 = vld [vmem:[#allocation2] sm:$0xff]
        %v236 = vld [vmem:[%s199] sm:$0xff]
        %v237 = vld [vmem:[#allocation6] sm:$0xff]
        %v238 = vld [vmem:[#allocation6 + $0x8] sm:$0xff]
        %v239 = vld [vmem:[#allocation6 + $0x10] sm:$0xff]
        %v240 = vld [vmem:[#allocation6 + $0x18] sm:$0xff]
        %vm241 = vcmask 261120
        %v243 = vsel %vm241, %v236, 0
        %245 = vmatpush.msra.mxu0 0.0
        %246 = vmatpush.msra.mxu0 0.0
        %247 = vmatpush.msra.mxu0 0.0
        %248 = vmatpush.msra.mxu0 0.0
        %249 = vmatpush.msra.mxu0 0.0
        %250 = vmatpush.msra.mxu0 0.0
        %251 = vmatpush.msra.mxu0 0.0
        %252 = vmatpush.msra.mxu0 0.0
        %253 = vmatpush.msra.mxu0 0.0
        %254 = vmatpush.msra.mxu0 0.0
        %255 = vmatpush.msra.mxu0 0.0
        %256 = vmatpush.msra.mxu0 0.0
        %257 = vmatpush.msra.mxu0 %v240
        %258 = vmatpush.msra.mxu0 %v239
        %259 = vmatpush.msra.mxu0 %v238
        %260 = vmatpush.msra.mxu0 %v237
        %261 = vmatmul.f32.gmra.mxu0 %v243
        %v262 = vpop.f32.mrf.mxu0
        %v263 = vadd.f32 0.0, %v262
        %264 = vdwg.mxu0
        %v265 = vadd.f32 %v235, %v263
        %vm266 = vcmask 523264
        %267 = vst.msk [vmem:[#allocation2] sm:$0xff] %vm266, %v265
        // Predicated region
        $region45: #{vanilla_prefix_forward.1} parent=31 // pred_check
          %p268 = pneg %p229
        $region46: #{vanilla_prefix_forward.1} parent=31 // pred_check_branch
          %270 = sbr.rel (%p268) target = $region48
        $region47: #{vanilla_prefix_forward.1} parent=31 // pred_region
          %v271 = vld [vmem:[#allocation2] sm:$0xff]
          %v272 = vld [vmem:[%s2] sm:$0x1]
          %v274 = vperm.slane %v272, 0
          %v276 = vadd.f32 %v271, %v274
          %277 = vst.msk [vmem:[%s227] sm:$0xff] %vm241, 0.0
          %279 = vrot.lane.b32.xlu0 %v276, 32
          %v280 = vpop.permute.xlu0 %279
          %vm282 = vcmask 785664
          %283 = vst.msk [vmem:[%s227] sm:$0xff] %vm282, %v280
        $region48: #{vanilla_prefix_forward.1} parent=31 // pred_fallthru
          _
        %s284 = sand.u32 %s116, 1
        %s285 = scalar_lea.sflag [#allocation5], %s284
        %s286 = sand.u32 %s116, 1
        %s287 = smul.addr %s286, 8
        %s288 = scalar_lea.vmem [#allocation8], %s287
        // Predicated region
        $region49: #{vanilla_prefix_forward.1} parent=31 // pred_check
          %p289 = pneg %p126
        $region50: #{vanilla_prefix_forward.1} parent=31 // pred_check_branch
          %291 = sbr.rel (%p289) target = $region52
        $region51: #{vanilla_prefix_forward.1} parent=31 // pred_region
          %293 = vsyncadd %s285, 0
          %s294 = smul.addr %s25, 8
          %s295 = scalar_lea.hbm %s3, %s294
          %s297 = sshll.u32 %s288, 4
          %s298 = int_to_ptr.vmem [resolvable:$true] %s297
          %s299 = sshll.u32 %s295, 4
          %s300 = int_to_ptr.hbm [resolvable:$true] %s299
          %302 = dma.vmem_to_hbm [thread:$0]  %s298, 128, %s300, %s285
        $region52: #{vanilla_prefix_forward.1} parent=31 // pred_fallthru
          _
      $region32: #{vanilla_prefix_forward.1} parent=5 // pred_fallthru
        _
      %p303 = scmp.le.s32.totalorder 2, %s16
      // Predicated region
      $region53: #{vanilla_prefix_forward.1} parent=5 // pred_check
        %p304 = pneg %p303
      $region54: #{vanilla_prefix_forward.1} parent=5 // pred_check_branch
        %306 = sbr.rel (%p304) target = $region56
      $region55: #{vanilla_prefix_forward.1} parent=5 // pred_region
        %s307 = ssub.s32 %s16, 2
        // Predicated region
        $region57: #{vanilla_prefix_forward.1} parent=55 // pred_check
          %p308 = pneg %p132
        $region58: #{vanilla_prefix_forward.1} parent=55 // pred_check_branch
          %310 = sbr.rel (%p308) target = $region60
        $region59: #{vanilla_prefix_forward.1} parent=55 // pred_region
          %s311 = sand.u32 %s117, 1
          %s312 = scalar_lea.sflag [#allocation5], %s311
          %s313 = sand.u32 %s117, 1
          %s314 = smul.addr %s313, 8
          %s315 = scalar_lea.vmem [#allocation8], %s314
          %317 = dma.done %s312, 128
        $region60: #{vanilla_prefix_forward.1} parent=55 // pred_fallthru
          _
      $region56: #{vanilla_prefix_forward.1} parent=5 // pred_fallthru
        _
    $region6: #{vanilla_prefix_forward.1} parent=1 // loop_footer
      %s20 = sadd.s32 1, %s16
    $region7: #{vanilla_prefix_forward.1} parent=1 // loop_footer_branch
      %15 = sbr.rel target = $region3
    $region8: #{vanilla_prefix_forward.1} parent=1 // loop_exit
      _
    %318 = vsyncpa [#allocation4], 1
    %s319 = scalar_lea.sflag [#allocation4], 1
    %320 = vsyncpa %s319, 1
    %321 = vsyncpa [#allocation7], 1
    %322 = vsyncpa [#allocation5], 1
    %s323 = scalar_lea.sflag [#allocation5], 1
    %324 = vsyncpa %s323, 1

</llo_original>
